<compile_context>
chip_gen: v7x
topology: tpu7x:2x2x1
jax: 0.10.0
libtpu: 0.0.40
codegen_flags: <defaults>
</compile_context>

<pallas_src>
import jax
import jax.numpy as jnp
from jax.experimental import pallas as pl
from jax.experimental.pallas import tpu as pltpu

_LANE = 128
_BN_EPS = 1e-5


def predictor_kernel(x_ref, w1_ref, gamma_ref, beta_ref, w2_ref, b2_ref, o_ref):
    # ---- Linear 1 (bias-free; b1 cancels under train-mode BN): (B,D)@(D,H) ----
    x = x_ref[...]
    y = jnp.dot(x, w1_ref[...], preferred_element_type=jnp.float32)   # (B, H)

    # ---- BatchNorm1d (training semantics) folded to per-feature scale/shift ----
    mean = jnp.mean(y, axis=0, keepdims=True)                          # (1, H)
    diff = y - mean
    var = jnp.mean(diff * diff, axis=0, keepdims=True)                 # (1, H)
    a = gamma_ref[...] * jax.lax.rsqrt(var + _BN_EPS)                  # (1, H)
    c = beta_ref[...] - mean * a                                       # (1, H)

    # ---- scale/shift + ReLU: 2 VPU ops/elem on the (B,H) tile ----
    h = jnp.maximum(y * a + c, 0.0)

    # ---- Linear 2: (B,H) @ (H,P_pad) + (1,P_pad) -> lane-dense (B,P_pad) ----
    o_ref[...] = (jnp.dot(h, w2_ref[...], preferred_element_type=jnp.float32)
                  + b2_ref[...])


def prepare_params(w1, b1, gamma, beta, w2, b2):
    """One-time parameter preparation (NOT on the per-forward path).

    PyTorch shapes: w1 (H, D), b1 (H,), gamma/beta (H,), w2 (P, H), b2 (P,).
    Pre-transposes the weights, folds away b1 (exactly cancelled by train-mode
    BN), reshapes 1-D params to (1, H) rows, and pads the output feature dim
    to a multiple of 128 lanes so the kernel's store path is lane-dense.
    """
    del b1  # absorbed by the BatchNorm mean subtraction -> mathematically a no-op
    H = w1.shape[0]
    P = w2.shape[0]
    P_pad = max(_LANE, ((P + _LANE - 1) // _LANE) * _LANE)

    w1_t = jnp.asarray(w1, jnp.float32).T                      # (D, H)
    w2_t = jnp.asarray(w2, jnp.float32).T                      # (H, P)
    w2_t_pad = jnp.zeros((H, P_pad), jnp.float32).at[:, :P].set(w2_t)
    b2_pad = jnp.zeros((1, P_pad), jnp.float32).at[0, :P].set(
        jnp.asarray(b2, jnp.float32))
    gamma_2d = jnp.asarray(gamma, jnp.float32).reshape(1, H)
    beta_2d = jnp.asarray(beta, jnp.float32).reshape(1, H)
    return (w1_t, gamma_2d, beta_2d, w2_t_pad, b2_pad, P)


def predictor_forward(x, params):
    """x: (B, D) float32;  params: output of prepare_params."""
    w1_t, gamma_2d, beta_2d, w2_t_pad, b2_pad, P = params
    B = x.shape[0]
    P_pad = w2_t_pad.shape[1]

    # Shapes are small: everything fits VMEM as single full-array blocks
    # (block_shape == full array, so no (8,128) divisibility constraint).
    out_pad = pl.pallas_call(
        predictor_kernel,
        out_shape=jax.ShapeDtypeStruct((B, P_pad), jnp.float32),
        in_specs=[
            pl.BlockSpec(memory_space=pltpu.MemorySpace.VMEM),  # x
            pl.BlockSpec(memory_space=pltpu.MemorySpace.VMEM),  # w1_t
            pl.BlockSpec(memory_space=pltpu.MemorySpace.VMEM),  # gamma
            pl.BlockSpec(memory_space=pltpu.MemorySpace.VMEM),  # beta
            pl.BlockSpec(memory_space=pltpu.MemorySpace.VMEM),  # w2_t (padded)
            pl.BlockSpec(memory_space=pltpu.MemorySpace.VMEM),  # b2   (padded)
        ],
        out_specs=pl.BlockSpec(memory_space=pltpu.MemorySpace.VMEM),
    )(x, w1_t, gamma_2d, beta_2d, w2_t_pad, b2_pad)

    return out_pad[:, :P]


def reference_forward(x, w1, b1, gamma, beta, w2, b2):
    """Pure-JAX reference mirroring the PyTorch forward (train-mode BN)."""
    y = x @ w1.T + b1
    mean = jnp.mean(y, axis=0, keepdims=True)
    var = jnp.mean((y - mean) ** 2, axis=0, keepdims=True)
    z = (y - mean) / jnp.sqrt(var + _BN_EPS) * gamma + beta
    h = jnp.maximum(z, 0.0)
    return h @ w2.T + b2


if __name__ == "__main__":
    # Small shapes consistent with Predictor(dim, prediction_size, hidden):
    B, DIM, HIDDEN, PRED = 8, 32, 128, 32

    key = jax.random.PRNGKey(0)
    kx, k1, kb1, kg, kb, k2, kb2 = jax.random.split(key, 7)

    x = jax.random.normal(kx, (B, DIM), dtype=jnp.float32)

    # Deterministic parameter init (PyTorch shapes: Linear weight = (out, in)).
    w1 = jax.random.normal(k1, (HIDDEN, DIM), dtype=jnp.float32) * 0.05
    b1 = jax.random.normal(kb1, (HIDDEN,), dtype=jnp.float32) * 0.01
    gamma = 1.0 + 0.1 * jax.random.normal(kg, (HIDDEN,), dtype=jnp.float32)
    beta = 0.1 * jax.random.normal(kb, (HIDDEN,), dtype=jnp.float32)
    w2 = jax.random.normal(k2, (PRED, HIDDEN), dtype=jnp.float32) * 0.05
    b2 = jax.random.normal(kb2, (PRED,), dtype=jnp.float32) * 0.01

    # One-time parameter prep (hoisted out of the forward path).
    params = prepare_params(w1, b1, gamma, beta, w2, b2)
    params = jax.block_until_ready(params)

    out = predictor_forward(x, params)
    out = jax.block_until_ready(out)

    ref = reference_forward(x, w1, b1, gamma, beta, w2, b2)
    assert out.shape == (B, PRED)
    assert jnp.allclose(out, ref, atol=1e-4, rtol=1e-4), "mismatch vs reference"

    print("KERNEL_OK")
</pallas_src>

<mosaic_0001>
module attributes {stable_mosaic.version = 11 : i64} {
  func.func @predictor_kernel(%arg0: memref<8x32xf32, #tpu.memory_space<vmem>>, %arg1: memref<32x128xf32, #tpu.memory_space<vmem>>, %arg2: memref<1x128xf32, #tpu.memory_space<vmem>>, %arg3: memref<1x128xf32, #tpu.memory_space<vmem>>, %arg4: memref<128x128xf32, #tpu.memory_space<vmem>>, %arg5: memref<1x128xf32, #tpu.memory_space<vmem>>, %arg6: memref<8x128xf32, #tpu.memory_space<vmem>>) attributes {dimension_semantics = [], scalar_prefetch = 0 : i64, scratch_operands = 0 : i64, tpu.core_type = #tpu.core_type<tc>} {
    %c0 = arith.constant 0 : index
    %c0_0 = arith.constant 0 : index
    %0 = vector.load %arg0[%c0, %c0_0] : memref<8x32xf32, #tpu.memory_space<vmem>>, vector<8x32xf32>
    %c0_1 = arith.constant 0 : index
    %c0_2 = arith.constant 0 : index
    %1 = vector.load %arg1[%c0_1, %c0_2] : memref<32x128xf32, #tpu.memory_space<vmem>>, vector<32x128xf32>
    %cst = arith.constant dense<0.000000e+00> : vector<8x128xf32>
    %2 = tpu.matmul %0, %1, %cst {dimension_numbers = #tpu.dot_dimension_numbers<[1], [0], [0], [1], [0, 0, 1, 1], [], []>} : vector<8x32xf32>, vector<32x128xf32>, vector<8x128xf32> -> vector<8x128xf32>
    %cst_3 = arith.constant dense<0.000000e+00> : vector<128xf32>
    %3 = vector.multi_reduction <add>, %2, %cst_3 [0] : vector<8x128xf32> to vector<128xf32>
    %4 = vector.shape_cast %3 : vector<128xf32> to vector<1x128xf32>
    %cst_4 = arith.constant 8.000000e+00 : f32
    %5 = vector.broadcast %cst_4 : f32 to vector<1x128xf32>
    %6 = arith.divf %4, %5 : vector<1x128xf32>
    %7 = vector.broadcast %6 : vector<1x128xf32> to vector<8x128xf32>
    %8 = arith.subf %2, %7 : vector<8x128xf32>
    %9 = arith.mulf %8, %8 : vector<8x128xf32>
    %cst_5 = arith.constant dense<0.000000e+00> : vector<128xf32>
    %10 = vector.multi_reduction <add>, %9, %cst_5 [0] : vector<8x128xf32> to vector<128xf32>
    %11 = vector.shape_cast %10 : vector<128xf32> to vector<1x128xf32>
    %cst_6 = arith.constant 8.000000e+00 : f32
    %12 = vector.broadcast %cst_6 : f32 to vector<1x128xf32>
    %13 = arith.divf %11, %12 : vector<1x128xf32>
    %c0_7 = arith.constant 0 : index
    %c0_8 = arith.constant 0 : index
    %14 = vector.load %arg2[%c0_7, %c0_8] : memref<1x128xf32, #tpu.memory_space<vmem>>, vector<1x128xf32>
    %cst_9 = arith.constant 9.99999974E-6 : f32
    %15 = vector.broadcast %cst_9 : f32 to vector<1x128xf32>
    %16 = arith.addf %13, %15 : vector<1x128xf32>
    %17 = math.rsqrt %16 : vector<1x128xf32>
    %18 = arith.mulf %14, %17 : vector<1x128xf32>
    %c0_10 = arith.constant 0 : index
    %c0_11 = arith.constant 0 : index
    %19 = vector.load %arg3[%c0_10, %c0_11] : memref<1x128xf32, #tpu.memory_space<vmem>>, vector<1x128xf32>
    %20 = arith.mulf %6, %18 : vector<1x128xf32>
    %21 = arith.subf %19, %20 : vector<1x128xf32>
    %22 = vector.broadcast %18 : vector<1x128xf32> to vector<8x128xf32>
    %23 = arith.mulf %2, %22 : vector<8x128xf32>
    %24 = vector.broadcast %21 : vector<1x128xf32> to vector<8x128xf32>
    %25 = arith.addf %23, %24 : vector<8x128xf32>
    %cst_12 = arith.constant 0.000000e+00 : f32
    %26 = vector.broadcast %cst_12 : f32 to vector<8x128xf32>
    %27 = arith.maximumf %25, %26 : vector<8x128xf32>
    %c0_13 = arith.constant 0 : index
    %c0_14 = arith.constant 0 : index
    %28 = vector.load %arg4[%c0_13, %c0_14] : memref<128x128xf32, #tpu.memory_space<vmem>>, vector<128x128xf32>
    %cst_15 = arith.constant dense<0.000000e+00> : vector<8x128xf32>
    %29 = tpu.matmul %27, %28, %cst_15 {dimension_numbers = #tpu.dot_dimension_numbers<[1], [0], [0], [1], [0, 0, 1, 1], [], []>} : vector<8x128xf32>, vector<128x128xf32>, vector<8x128xf32> -> vector<8x128xf32>
    %c0_16 = arith.constant 0 : index
    %c0_17 = arith.constant 0 : index
    %30 = vector.load %arg5[%c0_16, %c0_17] : memref<1x128xf32, #tpu.memory_space<vmem>>, vector<1x128xf32>
    %31 = vector.broadcast %30 : vector<1x128xf32> to vector<8x128xf32>
    %32 = arith.addf %29, %31 : vector<8x128xf32>
    %c0_18 = arith.constant 0 : index
    %c0_19 = arith.constant 0 : index
    %33 = vector.load %arg6[%c0_18, %c0_19] : memref<8x128xf32, #tpu.memory_space<vmem>>, vector<8x128xf32>
    tpu.vector_store %arg6[%c0_18, %c0_19], %32 {strides = array<i32>} : memref<8x128xf32, #tpu.memory_space<vmem>>, vector<8x128xf32>,
    return
  }
}

</mosaic_0001>

<llo_original>
// kernel: tpu_custom_call.1
$region0: #{tpu_custom_call.1}
  #allocation0 [shape = 'u32[]', space=smem, size = 0x4, offset = 0x4, fixed_abs, tag = 'smem constant byte address 0x4 - core index']
  #allocation1 [shape = 'u32[144,128]{1,0:T(1,128)}', space=vmem, size = 0x12000, scoped, tag = 'internal scratch']
  %s0 = inlined_call_operand.hbm [shape: f32[8,32], index: 0, kind: input, shape index: {}]
  %s1 = inlined_call_operand.hbm [shape: f32[32,128], index: 1, kind: input, shape index: {}]
  %s2 = inlined_call_operand.vmem [shape: f32[1,128], index: 2, kind: input, shape index: {}]
  %s3 = inlined_call_operand.vmem [shape: f32[1,128], index: 3, kind: input, shape index: {}]
  %s4 = inlined_call_operand.hbm [shape: f32[128,128], index: 4, kind: input, shape index: {}]
  %s5 = inlined_call_operand.vmem [shape: f32[1,128], index: 5, kind: input, shape index: {}]
  %s6 = inlined_call_operand.hbm [shape: f32[8,128], index: 6, kind: output, shape index: {}]
  %s7 = sld [smem:[#allocation0]]
  $region46: #{tpu_custom_call.1} parent=0
    _
  %s9 = ssub.s32 1, %s7
  %s10 = scalar_select 0, %s9, %s7
  $region1: #{tpu_custom_call.1} parent=0
    #allocation2 [shape = 'u8[4096]{0}', space=vmem, size = 0x1000, scoped, tag = 'input window, operand 0, single buffered']
    #allocation3 [shape = 's32[1]{0}', space=sflag, size = 0x4, scoped, tag = 'scoped memory for tpu_custom_call.1']
    #allocation4 [shape = 's32[1]{0}', space=sflag, size = 0x4, scoped, tag = 'scoped memory for tpu_custom_call.1']
    #allocation5 [shape = 'u8[16384]{0}', space=vmem, size = 0x4000, scoped, tag = 'input window, operand 1, single buffered']
    #allocation6 [shape = 's32[1]{0}', space=sflag, size = 0x4, scoped, tag = 'scoped memory for tpu_custom_call.1']
    #allocation7 [shape = 'u8[65536]{0}', space=vmem, size = 0x10000, scoped, tag = 'input window, operand 4, single buffered']
    #allocation8 [shape = 'u8[4096]{0}', space=vmem, size = 0x1000, scoped, tag = 'output window, operand 0, single buffered']
    %11 = vsyncpa [#allocation3], 0
    %12 = vsyncpa [#allocation6], 0
    %13 = vsyncpa [#allocation4], 0
    // Predicated region
    $region2: #{tpu_custom_call.1} parent=1 // pred_check
      _
    $region3: #{tpu_custom_call.1} parent=1 // pred_check_branch
      %15 = sbr.rel (0) target = $region5
    $region4: #{tpu_custom_call.1} parent=1 // pred_region
      %s17 = ssub.s32 128, 128
      %18 = vsyncadd [#allocation3], %s17
      %s20 = sshll.u32 [#allocation2], 4
      %s21 = int_to_ptr.vmem [resolvable:$true] %s20
      %23 = dma.hbm_to_vmem [thread:$0]  %s0, 128, %s21, [#allocation3]
    $region5: #{tpu_custom_call.1} parent=1 // pred_fallthru
      _
    // Predicated region
    $region6: #{tpu_custom_call.1} parent=1 // pred_check
      _
    $region7: #{tpu_custom_call.1} parent=1 // pred_check_branch
      %25 = sbr.rel (0) target = $region9
    $region8: #{tpu_custom_call.1} parent=1 // pred_region
      %s27 = ssub.s32 512, 512
      %28 = vsyncadd [#allocation6], %s27
      %s29 = sshll.u32 [#allocation5], 4
      %s30 = int_to_ptr.vmem [resolvable:$true] %s29
      %35 = dma.hbm_to_vmem [thread:$0]  %s1, 512, %s30, [#allocation6], 128, 128, 8
    $region9: #{tpu_custom_call.1} parent=1 // pred_fallthru
      _
    // Predicated region
    $region10: #{tpu_custom_call.1} parent=1 // pred_check
      _
    $region11: #{tpu_custom_call.1} parent=1 // pred_check_branch
      %37 = sbr.rel (0) target = $region13
    $region12: #{tpu_custom_call.1} parent=1 // pred_region
      _
    $region13: #{tpu_custom_call.1} parent=1 // pred_fallthru
      _
    // Predicated region
    $region14: #{tpu_custom_call.1} parent=1 // pred_check
      _
    $region15: #{tpu_custom_call.1} parent=1 // pred_check_branch
      %39 = sbr.rel (0) target = $region17
    $region16: #{tpu_custom_call.1} parent=1 // pred_region
      _
    $region17: #{tpu_custom_call.1} parent=1 // pred_fallthru
      _
    // Predicated region
    $region18: #{tpu_custom_call.1} parent=1 // pred_check
      _
    $region19: #{tpu_custom_call.1} parent=1 // pred_check_branch
      %41 = sbr.rel (0) target = $region21
    $region20: #{tpu_custom_call.1} parent=1 // pred_region
      %s43 = ssub.s32 2048, 2048
      %44 = vsyncadd [#allocation6], %s43
      %s45 = sshll.u32 [#allocation7], 4
      %s46 = int_to_ptr.vmem [resolvable:$true] %s45
      %51 = dma.hbm_to_vmem [thread:$0]  %s4, 2048, %s46, [#allocation6], 128, 128, 8
    $region21: #{tpu_custom_call.1} parent=1 // pred_fallthru
      _
    // Predicated region
    $region22: #{tpu_custom_call.1} parent=1 // pred_check
      _
    $region23: #{tpu_custom_call.1} parent=1 // pred_check_branch
      %53 = sbr.rel (0) target = $region25
    $region24: #{tpu_custom_call.1} parent=1 // pred_region
      _
    $region25: #{tpu_custom_call.1} parent=1 // pred_fallthru
      _
    // Predicated region
    $region26: #{tpu_custom_call.1} parent=1 // pred_check
      _
    $region27: #{tpu_custom_call.1} parent=1 // pred_check_branch
      %55 = sbr.rel (0) target = $region29
    $region28: #{tpu_custom_call.1} parent=1 // pred_region
      %56 = dma.done [#allocation3], 128
    $region29: #{tpu_custom_call.1} parent=1 // pred_fallthru
      _
    // Predicated region
    $region30: #{tpu_custom_call.1} parent=1 // pred_check
      _
    $region31: #{tpu_custom_call.1} parent=1 // pred_check_branch
      %58 = sbr.rel (0) target = $region33
    $region32: #{tpu_custom_call.1} parent=1 // pred_region
      %59 = dma.done [#allocation6], 512
    $region33: #{tpu_custom_call.1} parent=1 // pred_fallthru
      _
    // Predicated region
    $region34: #{tpu_custom_call.1} parent=1 // pred_check
      _
    $region35: #{tpu_custom_call.1} parent=1 // pred_check_branch
      %61 = sbr.rel (0) target = $region37
    $region36: #{tpu_custom_call.1} parent=1 // pred_region
      %62 = dma.done [#allocation6], 2048
    $region37: #{tpu_custom_call.1} parent=1 // pred_fallthru
      _
    %v63 = vld [vmem:[#allocation2] sm:$0xff]
    %v64 = vld [vmem:[#allocation5] sm:$0xff]
    %v65 = vld [vmem:[#allocation5 + $0x8] sm:$0xff]
    %v66 = vld [vmem:[#allocation5 + $0x10] sm:$0xff]
    %v67 = vld [vmem:[#allocation5 + $0x18] sm:$0xff]
    %vm68 = vcmask 261120
    %v70 = vsel %vm68, %v63, 0
    %72 = vmatprep.subr.mxu0 0.0
    %73 = vmatpush1.msra.mxu0 %v64
    %74 = vmatprep.subr.mxu0 0.0
    %75 = vmatpush1.msra.mxu0 %v65
    %76 = vmatprep.subr.mxu0 0.0
    %77 = vmatpush1.msra.mxu0 %v66
    %78 = vmatprep.subr.mxu0 0.0
    %79 = vmatpush1.msra.mxu0 %v67
    %80 = vmatprep.subr.mxu0 0.0
    %81 = vmatpush1.msra.mxu0 0.0
    %82 = vmatprep.subr.mxu0 0.0
    %83 = vmatpush1.msra.mxu0 0.0
    %84 = vmatprep.subr.mxu0 0.0
    %85 = vmatpush1.msra.mxu0 0.0
    %86 = vmatprep.subr.mxu0 0.0
    %87 = vmatpush1.msra.mxu0 0.0
    %88 = vmatprep.subr.mxu0 0.0
    %89 = vmatpush1.msra.mxu0 0.0
    %90 = vmatprep.subr.mxu0 0.0
    %91 = vmatpush1.msra.mxu0 0.0
    %92 = vmatprep.subr.mxu0 0.0
    %93 = vmatpush1.msra.mxu0 0.0
    %94 = vmatprep.subr.mxu0 0.0
    %95 = vmatpush1.msra.mxu0 0.0
    %96 = vmatprep.subr.mxu0 0.0
    %97 = vmatpush1.msra.mxu0 0.0
    %98 = vmatprep.subr.mxu0 0.0
    %99 = vmatpush1.msra.mxu0 0.0
    %100 = vmatprep.subr.mxu0 0.0
    %101 = vmatpush1.msra.mxu0 0.0
    %102 = vmatprep.subr.mxu0 0.0
    %103 = vmatpush1.msra.mxu0 0.0
    %104 = vmatprep.subr.mxu0 0.0
    %105 = vmatpush1.msra.mxu0 0.0
    %106 = vmatprep.subr.mxu0 0.0
    %107 = vmatpush1.msra.mxu0 0.0
    %108 = vmatprep.subr.mxu0 0.0
    %109 = vmatpush1.msra.mxu0 0.0
    %110 = vmatprep.subr.mxu0 0.0
    %111 = vmatpush1.msra.mxu0 0.0
    %112 = vmatprep.subr.mxu0 0.0
    %113 = vmatpush1.msra.mxu0 0.0
    %114 = vmatprep.subr.mxu0 0.0
    %115 = vmatpush1.msra.mxu0 0.0
    %116 = vmatprep.subr.mxu0 0.0
    %117 = vmatpush1.msra.mxu0 0.0
    %118 = vmatprep.subr.mxu0 0.0
    %119 = vmatpush1.msra.mxu0 0.0
    %120 = vmatprep.subr.mxu0 0.0
    %121 = vmatpush1.msra.mxu0 0.0
    %122 = vmatprep.subr.mxu0 0.0
    %123 = vmatpush1.msra.mxu0 0.0
    %124 = vmatprep.subr.mxu0 0.0
    %125 = vmatpush1.msra.mxu0 0.0
    %126 = vmatprep.subr.mxu0 0.0
    %127 = vmatpush1.msra.mxu0 0.0
    %128 = vmatprep.subr.mxu0 0.0
    %129 = vmatpush1.msra.mxu0 0.0
    %130 = vmatprep.subr.mxu0 0.0
    %131 = vmatpush1.msra.mxu0 0.0
    %132 = vmatprep.subr.mxu0 0.0
    %133 = vmatpush1.msra.mxu0 0.0
    %134 = vmatprep.subr.mxu0 0.0
    %135 = vmatpush1.msra.mxu0 0.0
    %136 = vmatprep.mubr.f32.mxu0 0.0
    %137 = vmatmul.mubr.f32.gmra.mrb[0].mxu0 %v70
    %v138 = vpop.f32.mrb[0].mxu0
    %v139 = vadd.f32 0.0, %v138
    %v140 = vpop.f32.mrb[0].mxu0
    %141 = vdwg.mxu0
    %v142 = vrot.slane %v139, 4
    %v143 = vadd.f32 %v139, %v142
    %v144 = vrot.slane %v143, 2
    %v145 = vadd.f32 %v143, %v144
    %v146 = vrot.slane %v145, 1
    %v147 = vadd.f32 %v145, %v146
    %v148 = vrcp.pop 8.0
    %v149 = vmul.f32 %v147, %v148
    %v150 = vsub.f32 %v139, %v149
    %v151 = vmul.f32 %v150, %v150
    %v152 = vrot.slane %v151, 4
    %v153 = vadd.f32 %v151, %v152
    %v154 = vrot.slane %v153, 2
    %v155 = vadd.f32 %v153, %v154
    %v156 = vrot.slane %v155, 1
    %v157 = vadd.f32 %v155, %v156
    %v158 = vmul.f32 %v157, %v148
    %v159 = vld [vmem:[%s2] sm:$0x1]
    %v160 = vadd.f32 %v158, 1e-05
    %v161 = vrsqrt.pop %v160
    %v162 = vmul.f32 %v159, %v161
    %v163 = vld [vmem:[%s3] sm:$0x1]
    %v164 = vmul.f32 %v149, %v162
    %v165 = vsub.f32 %v163, %v164
    %v167 = vlaneseq
    %v168 = vshrl.u32 %v167, 7
    %v169 = vsub.s32 0, %v168
    %v170 = vrot.slane %v162, %v169
    %v172 = vmul.f32 %v139, %v170
    %v174 = vlaneseq
    %v175 = vshrl.u32 %v174, 7
    %v176 = vsub.s32 0, %v175
    %v177 = vrot.slane %v165, %v176
    %v179 = vadd.f32 %v172, %v177
    %v180 = vmax.f32 %v179, 0.0
    %v181 = vld [vmem:[#allocation7] sm:$0xff]
    %v182 = vld [vmem:[#allocation7 + $0x8] sm:$0xff]
    %v183 = vld [vmem:[#allocation7 + $0x10] sm:$0xff]
    %v184 = vld [vmem:[#allocation7 + $0x18] sm:$0xff]
    %v185 = vld [vmem:[#allocation7 + $0x20] sm:$0xff]
    %v186 = vld [vmem:[#allocation7 + $0x28] sm:$0xff]
    %v187 = vld [vmem:[#allocation7 + $0x30] sm:$0xff]
    %v188 = vld [vmem:[#allocation7 + $0x38] sm:$0xff]
    %v189 = vld [vmem:[#allocation7 + $0x40] sm:$0xff]
    %v190 = vld [vmem:[#allocation7 + $0x48] sm:$0xff]
    %v191 = vld [vmem:[#allocation7 + $0x50] sm:$0xff]
    %v192 = vld [vmem:[#allocation7 + $0x58] sm:$0xff]
    %v193 = vld [vmem:[#allocation7 + $0x60] sm:$0xff]
    %v194 = vld [vmem:[#allocation7 + $0x68] sm:$0xff]
    %v195 = vld [vmem:[#allocation7 + $0x70] sm:$0xff]
    %v196 = vld [vmem:[#allocation7 + $0x78] sm:$0xff]
    %v197 = vld [vmem:[%s5] sm:$0x1]
    %v199 = vlaneseq
    %v200 = vshrl.u32 %v199, 7
    %v201 = vsub.s32 0, %v200
    %v202 = vrot.slane %v197, %v201
    %204 = vmatprep.subr.mxu0 0.0
    %205 = vmatpush1.msra.mxu0 %v181
    %206 = vmatprep.subr.mxu0 0.0
    %207 = vmatpush1.msra.mxu0 %v182
    %208 = vmatprep.subr.mxu0 0.0
    %209 = vmatpush1.msra.mxu0 %v183
    %210 = vmatprep.subr.mxu0 0.0
    %211 = vmatpush1.msra.mxu0 %v184
    %212 = vmatprep.subr.mxu0 0.0
    %213 = vmatpush1.msra.mxu0 %v185
    %214 = vmatprep.subr.mxu0 0.0
    %215 = vmatpush1.msra.mxu0 %v186
    %216 = vmatprep.subr.mxu0 0.0
    %217 = vmatpush1.msra.mxu0 %v187
    %218 = vmatprep.subr.mxu0 0.0
    %219 = vmatpush1.msra.mxu0 %v188
    %220 = vmatprep.subr.mxu0 0.0
    %221 = vmatpush1.msra.mxu0 %v189
    %222 = vmatprep.subr.mxu0 0.0
    %223 = vmatpush1.msra.mxu0 %v190
    %224 = vmatprep.subr.mxu0 0.0
    %225 = vmatpush1.msra.mxu0 %v191
    %226 = vmatprep.subr.mxu0 0.0
    %227 = vmatpush1.msra.mxu0 %v192
    %228 = vmatprep.subr.mxu0 0.0
    %229 = vmatpush1.msra.mxu0 %v193
    %230 = vmatprep.subr.mxu0 0.0
    %231 = vmatpush1.msra.mxu0 %v194
    %232 = vmatprep.subr.mxu0 0.0
    %233 = vmatpush1.msra.mxu0 %v195
    %234 = vmatprep.subr.mxu0 0.0
    %235 = vmatpush1.msra.mxu0 %v196
    %236 = vmatprep.subr.mxu0 0.0
    %237 = vmatpush1.msra.mxu0 0.0
    %238 = vmatprep.subr.mxu0 0.0
    %239 = vmatpush1.msra.mxu0 0.0
    %240 = vmatprep.subr.mxu0 0.0
    %241 = vmatpush1.msra.mxu0 0.0
    %242 = vmatprep.subr.mxu0 0.0
    %243 = vmatpush1.msra.mxu0 0.0
    %244 = vmatprep.subr.mxu0 0.0
    %245 = vmatpush1.msra.mxu0 0.0
    %246 = vmatprep.subr.mxu0 0.0
    %247 = vmatpush1.msra.mxu0 0.0
    %248 = vmatprep.subr.mxu0 0.0
    %249 = vmatpush1.msra.mxu0 0.0
    %250 = vmatprep.subr.mxu0 0.0
    %251 = vmatpush1.msra.mxu0 0.0
    %252 = vmatprep.subr.mxu0 0.0
    %253 = vmatpush1.msra.mxu0 0.0
    %254 = vmatprep.subr.mxu0 0.0
    %255 = vmatpush1.msra.mxu0 0.0
    %256 = vmatprep.subr.mxu0 0.0
    %257 = vmatpush1.msra.mxu0 0.0
    %258 = vmatprep.subr.mxu0 0.0
    %259 = vmatpush1.msra.mxu0 0.0
    %260 = vmatprep.subr.mxu0 0.0
    %261 = vmatpush1.msra.mxu0 0.0
    %262 = vmatprep.subr.mxu0 0.0
    %263 = vmatpush1.msra.mxu0 0.0
    %264 = vmatprep.subr.mxu0 0.0
    %265 = vmatpush1.msra.mxu0 0.0
    %266 = vmatprep.subr.mxu0 0.0
    %267 = vmatpush1.msra.mxu0 0.0
    %268 = vmatprep.mubr.f32.mxu0 0.0
    %269 = vmatmul.mubr.f32.gmra.mrb[0].mxu0 %v180
    %v270 = vpop.f32.mrb[0].mxu0
    %v271 = vadd.f32 %v202, %v270
    %v272 = vpop.f32.mrb[0].mxu0
    %273 = vdwg.mxu0
    %274 = vst [vmem:[#allocation8] sm:$0xff] %v271
    // Predicated region
    $region38: #{tpu_custom_call.1} parent=1 // pred_check
      _
    $region39: #{tpu_custom_call.1} parent=1 // pred_check_branch
      %276 = sbr.rel (0) target = $region41
    $region40: #{tpu_custom_call.1} parent=1 // pred_region
      %s278 = ssub.s32 128, 128
      %279 = vsyncadd [#allocation4], %s278
      %s281 = sshll.u32 [#allocation8], 4
      %s282 = int_to_ptr.vmem [resolvable:$true] %s281
      %284 = dma.vmem_to_hbm [thread:$0]  %s282, 128, %s6, [#allocation4]
    $region41: #{tpu_custom_call.1} parent=1 // pred_fallthru
      _
    // Predicated region
    $region42: #{tpu_custom_call.1} parent=1 // pred_check
      _
    $region43: #{tpu_custom_call.1} parent=1 // pred_check_branch
      %286 = sbr.rel (0) target = $region45
    $region44: #{tpu_custom_call.1} parent=1 // pred_region
      %287 = dma.done [#allocation4], 128
    $region45: #{tpu_custom_call.1} parent=1 // pred_fallthru
      _
    %288 = vsyncpa [#allocation3], 1
    %289 = vsyncpa [#allocation6], 1
    %290 = vsyncpa [#allocation4], 1

</llo_original>
